<compile_context>
chip_gen: v6e
topology: v6e:2x2x1
jax: 0.10.0
libtpu: 0.0.40
codegen_flags: <defaults>
</compile_context>

<pallas_src>
import functools

import jax
import jax.numpy as jnp
from jax.experimental import pallas as pl
from jax.experimental.pallas import tpu as pltpu


# ---------------------------------------------------------------------------
# Pallas kernel: one (n, m) tile of weight @ patches + bias + activation
# ---------------------------------------------------------------------------
def _fc_kernel(w_ref, x_ref, b_ref, o_ref, *, activation):
    # w_ref: (Cp, K) bf16    x_ref: (1, K, TM) bf16    b_ref: (Cp, 1) f32
    # o_ref: (1, Cp, TM) f32 -- TM on the lane axis => lane-dense stores,
    # no Cout padding to 128 (avoids 16x masked-store write amplification).
    acc = jnp.dot(w_ref[...], x_ref[0], preferred_element_type=jnp.float32)
    acc = acc + b_ref[...]                      # broadcast (Cp,1) over lanes
    if activation == "relu":
        acc = jnp.maximum(acc, 0.0)
    elif activation == "sigmoid":
        acc = jax.nn.sigmoid(acc)               # EUP slot, effectively free
    # activation is None -> identity
    o_ref[0] = acc.astype(o_ref.dtype)


# ---------------------------------------------------------------------------
# Tiling helpers
# ---------------------------------------------------------------------------
def _vmem_budget_bytes():
    # Generation-aware: v5e/v6e have 128 MiB VMEM per TC, v7x only 64 MiB.
    try:
        cap = int(pltpu.get_tpu_info().vmem_capacity_bytes)
    except Exception:
        cap = 64 << 20                          # conservative (v7x per-TC)
    # Leave headroom for compiler-internal scratch; cap at ~48 MiB.
    return max(16 << 20, min(int(cap * 0.6), 48 << 20))


def _footprint_bytes(Cp, K, tm):
    x_tile = K * tm * 2                         # bf16, double-buffered
    o_tile = Cp * tm * 4                        # f32, double-buffered
    w_blk = Cp * K * 2                          # bf16, resident
    b_blk = Cp * 1 * 4                          # f32, resident
    return 2 * (x_tile + o_tile + w_blk + b_blk)


def _pick_tm(ohw, K, Cp, budget):
    """K-aware lane tile: ~2 MiB of X per grid step, clamped to the VMEM
    budget and to the per-image spatial extent (blocks never span N)."""
    ohw128 = pl.cdiv(ohw, 128) * 128
    tm = (2 << 20) // max(2 * K, 1)             # target bytes / bf16 row bytes
    tm = max(128, min((tm // 128) * 128, 8192, ohw128))
    # VMEM safety clamp.
    while tm > 128 and _footprint_bytes(Cp, K, tm) > budget:
        tm = max(128, ((tm // 2) // 128) * 128)
    # v7x megacore: prefer an even spatial step count so both TensorCores get
    # equal work (no-op for single-step / single-TC cases).
    nm = pl.cdiv(ohw, tm)
    while nm >= 3 and nm % 2 == 1 and tm > 128:
        tm -= 128
        nm = pl.cdiv(ohw, tm)
    return tm


# ---------------------------------------------------------------------------
# Pallas-backed (N-batched) matmul: out[n] = act(W @ X[n] + b)
# ---------------------------------------------------------------------------
def _fc_matmul(w_ck, x_nkm, b_c1, activation):
    """w_ck: (Cout, K) bf16, x_nkm: (N, K, OHW) bf16, b_c1: (Cout, 1) f32.
    Returns (N, Cout, OHW) float32."""
    Cout, K = w_ck.shape
    N, _, OHW = x_nkm.shape

    Cp = max(8, ((Cout + 7) // 8) * 8)          # sublane-pad Cout only to 8
    budget = _vmem_budget_bytes()
    tm = _pick_tm(OHW, K, Cp, budget)
    nm = pl.cdiv(OHW, tm)
    M_pad = nm * tm

    if M_pad != OHW:
        x_nkm = jnp.pad(x_nkm, ((0, 0), (0, 0), (0, M_pad - OHW)))
    if Cp != Cout:
        w_ck = jnp.pad(w_ck, ((0, Cp - Cout), (0, 0)))
        b_c1 = jnp.pad(b_c1, ((0, Cp - Cout), (0, 0)))

    kernel = functools.partial(_fc_kernel, activation=activation)
    out = pl.pallas_call(
        kernel,
        out_shape=jax.ShapeDtypeStruct((N, Cp, M_pad), jnp.float32),
        grid_spec=pltpu.PrefetchScalarGridSpec(
            num_scalar_prefetch=0,
            grid=(N, nm),
            in_specs=[
                # Constant index_maps -> weight & bias fetched once, resident.
                pl.BlockSpec((Cp, K), lambda n, j: (0, 0)),
                pl.BlockSpec((1, K, tm), lambda n, j: (n, 0, j)),
                pl.BlockSpec((Cp, 1), lambda n, j: (0, 0)),
            ],
            out_specs=pl.BlockSpec((1, Cp, tm), lambda n, j: (n, 0, j)),
        ),
        compiler_params=pltpu.CompilerParams(
            dimension_semantics=("parallel", "parallel"),
            vmem_limit_bytes=budget,
        ),
    )(w_ck, x_nkm, b_c1)

    if Cp != Cout or M_pad != OHW:
        out = out[:, :Cout, :OHW]
    return out


# ---------------------------------------------------------------------------
# FCLayer forward (NCHW in / NCHW out, like the PyTorch module)
# ---------------------------------------------------------------------------
def fc_layer_forward(x_nchw, weight, bias, *, stride, padding, activation):
    """weight: (Cout, Cin, KH, KW) as in PyTorch. Returns NCHW output."""
    N, C, H, W = x_nchw.shape
    Cout, Cin, KH, KW = weight.shape
    assert Cin == C
    K = Cin * KH * KW

    # Patch extraction (pad + gather as one XLA identity conv).  Output channel
    # order is (cin, kh, kw) == weight.reshape(Cout, -1) order.  Casting to
    # bf16 *before* the gather is value-identical to casting after (patches
    # are pure copies) and halves the patch-matrix HBM traffic.
    patches = jax.lax.conv_general_dilated_patches(
        x_nchw.astype(jnp.bfloat16),
        filter_shape=(KH, KW),
        window_strides=(stride, stride),
        padding=[(padding, padding), (padding, padding)],
        dimension_numbers=("NCHW", "OIHW", "NCHW"),
    )  # (N, K, OH, OW)
    OH, OW = patches.shape[2], patches.shape[3]
    x_nkm = patches.reshape(N, K, OH * OW)      # free reshape (trailing dims)

    w_ck = weight.reshape(Cout, K).astype(jnp.bfloat16)   # (Cout, K)
    b_c1 = bias.astype(jnp.float32).reshape(Cout, 1)      # (Cout, 1)

    out = _fc_matmul(w_ck, x_nkm, b_c1, activation)       # (N, Cout, OH*OW)
    return out.reshape(N, Cout, OH, OW)                   # free reshape: NCHW


# ---------------------------------------------------------------------------
# main
# ---------------------------------------------------------------------------
if __name__ == "__main__":
    # FCLayer(in_channels=4, out_channels=8, filter_dim=3, stride=1,
    #         padding=1, activation='relu')
    N, Cin, H, W = 2, 4, 16, 16
    Cout, Kf, stride, padding = 8, 3, 1, 1
    activation = "relu"

    key = jax.random.PRNGKey(0)
    kx, kw, kb = jax.random.split(key, 3)

    x = jax.random.normal(kx, (N, Cin, H, W), dtype=jnp.float32)
    # Deterministic PyTorch-like uniform init: bound = 1/sqrt(fan_in)
    fan_in = Cin * Kf * Kf
    bound = 1.0 / (fan_in ** 0.5)
    weight = jax.random.uniform(kw, (Cout, Cin, Kf, Kf), jnp.float32, -bound, bound)
    bias = jax.random.uniform(kb, (Cout,), jnp.float32, -bound, bound)

    fwd = jax.jit(
        functools.partial(
            fc_layer_forward, stride=stride, padding=padding, activation=activation
        )
    )
    out = jax.block_until_ready(fwd(x, weight, bias))
    assert out.shape == (N, Cout, H, W), out.shape

    # Reference with the SAME operand precision (bf16 inputs, f32 accumulate),
    # so the tolerance stays tight and independent of K = Cin*KH*KW.
    ref = jax.lax.conv_general_dilated(
        x.astype(jnp.bfloat16), weight.astype(jnp.bfloat16),
        window_strides=(stride, stride),
        padding=[(padding, padding), (padding, padding)],
        dimension_numbers=("NCHW", "OIHW", "NCHW"),
        preferred_element_type=jnp.float32,
    ) + bias.reshape(1, Cout, 1, 1)
    ref = jnp.maximum(ref, 0.0)

    max_err = float(jnp.max(jnp.abs(out - ref)))
    assert jnp.allclose(out, ref, atol=2e-2, rtol=2e-2), (
        f"mismatch vs reference conv, max abs err = {max_err}"
    )

    print("KERNEL_OK")
</pallas_src>

<mosaic_0001>
module attributes {stable_mosaic.version = 11 : i64} {
  func.func @_fc_kernel(%arg0: i32, %arg1: i32, %arg2: memref<8x36xbf16, #tpu.memory_space<vmem>>, %arg3: memref<1x36x256xbf16, #tpu.memory_space<vmem>>, %arg4: memref<8x1xf32, #tpu.memory_space<vmem>>, %arg5: memref<1x8x256xf32, #tpu.memory_space<vmem>>) attributes {dimension_semantics = [#tpu.dimension_semantics<parallel>, #tpu.dimension_semantics<parallel>], iteration_bounds = array<i64: 2, 1>, scalar_prefetch = 0 : i64, scratch_operands = 0 : i64, tpu.core_type = #tpu.core_type<tc>, window_params = [{pipeline_mode = #tpu.pipeline_mode<synchronous>, transform_indices = @transform_0, window_bounds = array<i64: 8, 36>}, {transform_indices = @transform_1, window_bounds = array<i64: 1, 36, 256>}, {pipeline_mode = #tpu.pipeline_mode<synchronous>, transform_indices = @transform_2, window_bounds = array<i64: 8, 1>}, {transform_indices = @transform_3, window_bounds = array<i64: 1, 8, 256>}]} {
    %c0 = arith.constant 0 : index
    %c0_0 = arith.constant 0 : index
    %0 = vector.load %arg2[%c0, %c0_0] : memref<8x36xbf16, #tpu.memory_space<vmem>>, vector<8x36xbf16>
    %c0_1 = arith.constant 0 : index
    %c0_2 = arith.constant 0 : index
    %c0_3 = arith.constant 0 : index
    %1 = vector.load %arg3[%c0_1, %c0_2, %c0_3] : memref<1x36x256xbf16, #tpu.memory_space<vmem>>, vector<1x36x256xbf16>
    %2 = vector.shape_cast %1 : vector<1x36x256xbf16> to vector<36x256xbf16>
    %cst = arith.constant dense<0.000000e+00> : vector<8x256xf32>
    %3 = tpu.matmul %0, %2, %cst {dimension_numbers = #tpu.dot_dimension_numbers<[1], [0], [0], [1], [0, 0, 1, 1], [], []>} : vector<8x36xbf16>, vector<36x256xbf16>, vector<8x256xf32> -> vector<8x256xf32>
    %c0_4 = arith.constant 0 : index
    %c0_5 = arith.constant 0 : index
    %4 = vector.load %arg4[%c0_4, %c0_5] : memref<8x1xf32, #tpu.memory_space<vmem>>, vector<8x1xf32>
    %5 = vector.broadcast %4 : vector<8x1xf32> to vector<8x256xf32>
    %6 = arith.addf %3, %5 : vector<8x256xf32>
    %cst_6 = arith.constant 0.000000e+00 : f32
    %7 = vector.broadcast %cst_6 : f32 to vector<8x256xf32>
    %8 = arith.maximumf %6, %7 : vector<8x256xf32>
    %c0_7 = arith.constant 0 : index
    %c0_8 = arith.constant 0 : index
    %c0_9 = arith.constant 0 : index
    %9 = vector.load %arg5[%c0_7, %c0_8, %c0_9] : memref<1x8x256xf32, #tpu.memory_space<vmem>>, vector<1x8x256xf32>
    %10 = vector.shape_cast %9 : vector<1x8x256xf32> to vector<8x256xf32>
    %11 = vector.shape_cast %8 : vector<8x256xf32> to vector<1x8x256xf32>
    tpu.vector_store %arg5[%c0_7, %c0_8, %c0_9], %11 {strides = array<i32>} : memref<1x8x256xf32, #tpu.memory_space<vmem>>, vector<1x8x256xf32>,
    return
  }
  func.func @transform_0(%arg0: i32, %arg1: i32) -> (i32, i32) {
    %c0_i32 = arith.constant 0 : i32
    %c0_i32_0 = arith.constant 0 : i32
    %c0_i32_1 = arith.constant 0 : i32
    return %c0_i32, %c0_i32_0 : i32, i32
  }
  func.func @transform_1(%arg0: i32, %arg1: i32) -> (i32, i32, i32) {
    %c0_i32 = arith.constant 0 : i32
    %c0_i32_0 = arith.constant 0 : i32
    return %arg0, %c0_i32, %arg1 : i32, i32, i32
  }
  func.func @transform_2(%arg0: i32, %arg1: i32) -> (i32, i32) {
    %c0_i32 = arith.constant 0 : i32
    %c0_i32_0 = arith.constant 0 : i32
    %c0_i32_1 = arith.constant 0 : i32
    return %c0_i32, %c0_i32_0 : i32, i32
  }
  func.func @transform_3(%arg0: i32, %arg1: i32) -> (i32, i32, i32) {
    %c0_i32 = arith.constant 0 : i32
    %c0_i32_0 = arith.constant 0 : i32
    return %arg0, %c0_i32, %arg1 : i32, i32, i32
  }
}

</mosaic_0001>

<llo_original>
// kernel: fc_layer_forward.1
$region0: #{fc_layer_forward.1}
  #allocation0 [shape = 'u32[]', space=smem, size = 0x4, offset = 0x4, fixed_abs, tag = 'smem constant byte address 0x4 - core index']
  #allocation1 [shape = 'u32[144,128]{1,0:T(1,128)}', space=vmem, size = 0x12000, scoped, tag = 'internal scratch']
  %s0 = inlined_call_operand.vmem [shape: bf16[8,36], index: 0, kind: input, shape index: {}]
  %s1 = inlined_call_operand.vmem [shape: bf16[2,36,256], index: 1, kind: input, shape index: {}]
  %s2 = inlined_call_operand.vmem [shape: f32[8,1], index: 2, kind: input, shape index: {}]
  %s3 = inlined_call_operand.vmem [shape: f32[2,8,256], index: 3, kind: output, shape index: {}]
  %s4 = sld [smem:[#allocation0]]
  $region45: #{fc_layer_forward.1} parent=0
    _
  %s6 = ssub.s32 1, %s4
  %s7 = scalar_select 0, %s6, %s4
  loop: start=0, step=1, limit=4
  $region2: #{fc_layer_forward.1} parent=0 // loop_pre_header
    _
  $region3: #{fc_layer_forward.1} parent=0 // loop_header
    %s9 = sphi 0, %s13
    %p10 = scmp.ge.s32.totalorder %s9, 4
    %s16 = sphi 0, %s28
    %s17 = sphi 0, %s24
    %s18 = sphi 0, %s16
    %s19 = sphi 0, %s17
    %s20 = sphi 0, %s18
    %s21 = sphi 0, %s19
    %s29 = sphi 0, %s29
    %s31 = sphi 0, %s29
    %s32 = sphi 0, %s31
    %s46 = sphi 0, %s32
    %s54 = sphi 0, %s56
    %s57 = sphi 0, %s54
    %s58 = sphi 0, %s57
    %s74 = sphi 0, %s58
    %s78 = sphi 0, %s78
    %s80 = sphi 0, %s78
    %s81 = sphi 0, %s80
    %s95 = sphi 0, %s81
    %s103 = sphi 0, %s105
    %s106 = sphi 0, %s103
    %s107 = sphi 0, %s106
    %s123 = sphi 0, %s107
  $region4: #{fc_layer_forward.1} parent=0 // loop_header_branch
    %12 = sbr.rel (%p10) target = $region8
  $region5: #{fc_layer_forward.1} parent=0 // loop_body
    %s14 = ssub.s32 %s9, 1
    %s15 = ssub.s32 %s9, 2
    %s22 = sadd.s32 1, %s17
    %p23 = scmp.ge.s32.totalorder %s22, 1
    %s24 = scalar_select %p23, 0, %s22
    %s25 = sadd.s32 1, %s16
    %s26 = scalar_select %p23, %s25, %s16
    %p27 = scmp.ge.s32.totalorder %s26, 2
    %s28 = scalar_select %p27, 0, %s26
    %s30 = sadd.s32 %s29, 1
    %p33 = scmp.eq.s32.totalorder %s9, 1
    %p34 = scmp.ne.s32.totalorder %s29, %s31
    %p35 = scmp.eq.s32.totalorder %s9, 0
    %p36 = por %p34, %p35
    %p37 = scmp.ne.s32.totalorder %s29, %s31
    %p38 = scmp.eq.s32.totalorder %s14, 1
    %p39 = por %p37, %p38
    %p40 = scmp.ne.s32.totalorder %s31, %s32
    %p41 = scmp.eq.s32.totalorder %s14, 0
    %p42 = por %p40, %p41
    %p43 = scmp.ne.s32.totalorder %s31, %s32
    %p44 = scmp.eq.s32.totalorder %s15, 1
    %p45 = por %p43, %p44
    %p47 = scmp.ne.s32.totalorder %s32, %s46
    %p48 = scmp.eq.s32.totalorder %s15, 0
    %p49 = por %p47, %p48
    %s50 = ssub.s32 %s16, %s28
    %s51 = ssub.s32 %s17, %s24
    %s52 = sor.u32 %s50, %s51
    %p53 = scmp.eq.s32.totalorder %s52, 0
    %s55 = sadd.s32 %s54, 1
    %s56 = scalar_select %p53, %s54, %s55
    %p59 = pneg %p53
    %p60 = scmp.eq.s32.totalorder %s9, 1
    %p61 = por %p59, %p60
    %p62 = scmp.ne.s32.totalorder %s54, %s57
    %p63 = scmp.eq.s32.totalorder %s9, 0
    %p64 = por %p62, %p63
    %p65 = scmp.ne.s32.totalorder %s54, %s57
    %p66 = scmp.eq.s32.totalorder %s14, 1
    %p67 = por %p65, %p66
    %p68 = scmp.ne.s32.totalorder %s57, %s58
    %p69 = scmp.eq.s32.totalorder %s14, 0
    %p70 = por %p68, %p69
    %p71 = scmp.ne.s32.totalorder %s57, %s58
    %p72 = scmp.eq.s32.totalorder %s15, 1
    %p73 = por %p71, %p72
    %p75 = scmp.ne.s32.totalorder %s58, %s74
    %p76 = scmp.eq.s32.totalorder %s15, 0
    %p77 = por %p75, %p76
    %s79 = sadd.s32 %s78, 1
    %p82 = scmp.eq.s32.totalorder %s9, 1
    %p83 = scmp.ne.s32.totalorder %s78, %s80
    %p84 = scmp.eq.s32.totalorder %s9, 0
    %p85 = por %p83, %p84
    %p86 = scmp.ne.s32.totalorder %s78, %s80
    %p87 = scmp.eq.s32.totalorder %s14, 1
    %p88 = por %p86, %p87
    %p89 = scmp.ne.s32.totalorder %s80, %s81
    %p90 = scmp.eq.s32.totalorder %s14, 0
    %p91 = por %p89, %p90
    %p92 = scmp.ne.s32.totalorder %s80, %s81
    %p93 = scmp.eq.s32.totalorder %s15, 1
    %p94 = por %p92, %p93
    %p96 = scmp.ne.s32.totalorder %s81, %s95
    %p97 = scmp.eq.s32.totalorder %s15, 0
    %p98 = por %p96, %p97
    %s99 = ssub.s32 %s16, %s28
    %s100 = ssub.s32 %s17, %s24
    %s101 = sor.u32 %s99, %s100
    %p102 = scmp.eq.s32.totalorder %s101, 0
    %s104 = sadd.s32 %s103, 1
    %s105 = scalar_select %p102, %s103, %s104
    %p108 = pneg %p102
    %p109 = scmp.eq.s32.totalorder %s9, 1
    %p110 = por %p108, %p109
    %p111 = scmp.ne.s32.totalorder %s103, %s106
    %p112 = scmp.eq.s32.totalorder %s9, 0
    %p113 = por %p111, %p112
    %p114 = scmp.ne.s32.totalorder %s103, %s106
    %p115 = scmp.eq.s32.totalorder %s14, 1
    %p116 = por %p114, %p115
    %p117 = scmp.ne.s32.totalorder %s106, %s107
    %p118 = scmp.eq.s32.totalorder %s14, 0
    %p119 = por %p117, %p118
    %p120 = scmp.ne.s32.totalorder %s106, %s107
    %p121 = scmp.eq.s32.totalorder %s15, 1
    %p122 = por %p120, %p121
    %p124 = scmp.ne.s32.totalorder %s107, %s123
    %p125 = scmp.eq.s32.totalorder %s15, 0
    %p126 = por %p124, %p125
    %p127 = scmp.le.s32.totalorder 1, %s9
    %p128 = scmp.lt.s32.totalorder %s9, 3
    %p129 = pnand %p127, %p128
    %p130 = pneg %p129
    // Predicated region
    $region9: #{fc_layer_forward.1} parent=5 // pred_check
      _
    $region10: #{fc_layer_forward.1} parent=5 // pred_check_branch
      %132 = sbr.rel (%p129) target = $region12
    $region11: #{fc_layer_forward.1} parent=5 // pred_region
      %s133 = ssub.s32 %s9, 1
      // Predicated region
      $region13: #{fc_layer_forward.1} parent=11 // pred_check
        %p134 = pneg %p42
      $region14: #{fc_layer_forward.1} parent=11 // pred_check_branch
        %136 = sbr.rel (%p134) target = $region16
      $region15: #{fc_layer_forward.1} parent=11 // pred_region
        _
      $region16: #{fc_layer_forward.1} parent=11 // pred_fallthru
        _
      // Predicated region
      $region17: #{fc_layer_forward.1} parent=11 // pred_check
        %p137 = pneg %p91
      $region18: #{fc_layer_forward.1} parent=11 // pred_check_branch
        %139 = sbr.rel (%p137) target = $region20
      $region19: #{fc_layer_forward.1} parent=11 // pred_region
        _
      $region20: #{fc_layer_forward.1} parent=11 // pred_fallthru
        _
    $region12: #{fc_layer_forward.1} parent=5 // pred_fallthru
      _
    %p140 = scmp.lt.s32.totalorder %s9, 2
    // Predicated region
    $region21: #{fc_layer_forward.1} parent=5 // pred_check
      %p141 = pneg %p140
    $region22: #{fc_layer_forward.1} parent=5 // pred_check_branch
      %143 = sbr.rel (%p141) target = $region24
    $region23: #{fc_layer_forward.1} parent=5 // pred_region
      // Predicated region
      $region25: #{fc_layer_forward.1} parent=23 // pred_check
        %p144 = pneg %p64
      $region26: #{fc_layer_forward.1} parent=23 // pred_check_branch
        %146 = sbr.rel (%p144) target = $region28
      $region27: #{fc_layer_forward.1} parent=23 // pred_region
        %s147 = smul.u32 2, %s17
        %p148 = scmp.lt.s32.totalorder %s16, 1
        %s149 = scalar_select %p148, %s16, 1
        %p150 = scmp.lt.s32.totalorder %s147, 1
        %s151 = scalar_select %p150, %s147, 1
        %s152 = smul.addr %s149, 10
        %s153 = sadd.s32 %s151, %s152
        %s154 = smul.addr %s153, 4
        %s155 = scalar_lea.vmem %s1, %s154
        %s156 = smul.u32 2, %s17
      $region28: #{fc_layer_forward.1} parent=23 // pred_fallthru
        _
    $region24: #{fc_layer_forward.1} parent=5 // pred_fallthru
      _
    %p157 = scmp.le.s32.totalorder 1, %s9
    %p158 = scmp.lt.s32.totalorder %s9, 3
    %p159 = pnand %p157, %p158
    %p160 = pneg %p159
    // Predicated region
    $region29: #{fc_layer_forward.1} parent=5 // pred_check
      _
    $region30: #{fc_layer_forward.1} parent=5 // pred_check_branch
      %162 = sbr.rel (%p159) target = $region32
    $region31: #{fc_layer_forward.1} parent=5 // pred_region
      %s163 = ssub.s32 %s9, 1
      %p164 = pneg %p42
      %p165 = pneg %p39
      %s166 = smul.u32 2, %s19
      %p167 = scmp.lt.s32.totalorder %s18, 1
      %s168 = scalar_select %p167, %s18, 1
      %p169 = scmp.lt.s32.totalorder %s166, 1
      %s170 = scalar_select %p169, %s166, 1
      %s171 = smul.addr %s168, 10
      %s172 = sadd.s32 %s170, %s171
      %s173 = smul.addr %s172, 4
      %s174 = scalar_lea.vmem %s1, %s173
      %p175 = pneg %p70
      %p176 = pneg %p67
      %p177 = pneg %p91
      %p178 = pneg %p88
      %p179 = pneg %p119
      %p180 = pneg %p116
      %s181 = smul.u32 2, %s19
      %p182 = scmp.lt.s32.totalorder %s18, 1
      %s183 = scalar_select %p182, %s18, 1
      %p184 = scmp.lt.s32.totalorder %s181, 1
      %s185 = scalar_select %p184, %s181, 1
      %s186 = smul.addr %s183, 2
      %s187 = sadd.s32 %s185, %s186
      %s188 = smul.addr %s187, 8
      %s189 = scalar_lea.vmem %s3, %s188
      %s190 = smul.u32 2, %s19
      %p191 = scmp.lt.s32.totalorder %s18, 1
      %s192 = scalar_select %p191, %s18, 1
      %p193 = scmp.lt.s32.totalorder %s190, 1
      %s194 = scalar_select %p193, %s190, 1
      %s195 = smul.addr %s192, 10
      %s196 = sadd.s32 %s194, %s195
      %s197 = smul.addr %s196, 4
      %s198 = scalar_lea.vmem %s1, %s197
      %s199 = smul.u32 2, %s19
      %s200 = smul.u32 2, %s19
      %p201 = scmp.lt.s32.totalorder %s18, 1
      %s202 = scalar_select %p201, %s18, 1
      %p203 = scmp.lt.s32.totalorder %s200, 1
      %s204 = scalar_select %p203, %s200, 1
      %s205 = smul.addr %s202, 2
      %s206 = sadd.s32 %s204, %s205
      %s207 = smul.addr %s206, 8
      %s208 = scalar_lea.vmem %s3, %s207
      %s209 = smul.u32 2, %s19
      %v211 = vld [vmem:[%s0] sm:$0xf]
      %v212 = vld [vmem:[%s198] sm:$0xff]
      %v213 = vld [vmem:[%s198 + $0x8] sm:$0xff]
      %v214 = vld [vmem:[%s198 + $0x10] sm:$0xff]
      %v215 = vld [vmem:[%s198 + $0x18] sm:$0xff]
      %v216 = vld [vmem:[%s198 + $0x20] sm:$0x33]
      %v217 = vld [vmem:[%s2] sm:$0xff]
      %219 = vset.pattern.permute.xlu0 0
      %220 = vperm.xlu0 %219, %v217
      %v221 = vpop.permute.xlu0 %220
      %v228 = vunpack.c.l.b16 %v212
      %v229 = vunpack.c.h.b16 %v212
      %v230 = vunpack.c.l.b16 %v213
      %v231 = vunpack.c.h.b16 %v213
      %v232 = vunpack.c.l.b16 %v214
      %v233 = vunpack.c.h.b16 %v214
      %v234 = vunpack.c.l.b16 %v215
      %v235 = vunpack.c.h.b16 %v215
      %v236 = vunpack.c.l.b16 %v216
      %v237 = vunpack.c.h.b16 %v216
      %v238 = vpack.c.b16 %v230, %v228
      %v239 = vpack.c.b16 %v231, %v229
      %v240 = vpack.c.b16 %v234, %v232
      %v241 = vpack.c.b16 %v235, %v233
      %v242 = vpack.c.b16 %v236, %v236
      %v243 = vpack.c.b16 %v237, %v237
      %vm248 = vcmask 293888
      %v250 = vsel %vm248, %v211, 0
      %vm252 = vcmask 1041408
      %v254 = vsel %vm252, %v242, 0
      %v257 = vsel %vm252, %v243, 0
      %259 = vmatprep.subr.bf16.mxu0 0
      %260 = vmatpush1.bf16.msra.mxu0 0
      %261 = vmatprep.subr.bf16.mxu0 0
      %262 = vmatpush1.bf16.msra.mxu0 0
      %263 = vmatprep.subr.bf16.mxu0 0
      %264 = vmatpush1.bf16.msra.mxu0 0
      %265 = vmatprep.subr.bf16.mxu0 0
      %266 = vmatpush1.bf16.msra.mxu0 0
      %267 = vmatprep.subr.bf16.mxu0 0
      %268 = vmatpush1.bf16.msra.mxu0 0
      %269 = vmatprep.subr.bf16.mxu0 %v257
      %270 = vmatpush1.bf16.msra.mxu0 %v254
      %271 = vmatprep.subr.bf16.mxu0 %v241
      %272 = vmatpush1.bf16.msra.mxu0 %v240
      %273 = vmatprep.subr.bf16.mxu0 %v239
      %274 = vmatpush1.bf16.msra.mxu0 %v238
      %275 = vmatprep.subr.bf16.mxu0 0
      %276 = vmatpush2.bf16.msra.mxu0 0
      %277 = vmatprep.subr.bf16.mxu0 0
      %278 = vmatpush2.bf16.msra.mxu0 0
      %279 = vmatprep.subr.bf16.mxu0 0
      %280 = vmatpush2.bf16.msra.mxu0 0
      %281 = vmatprep.subr.bf16.mxu0 0
      %282 = vmatpush2.bf16.msra.mxu0 0
      %283 = vmatprep.subr.bf16.mxu0 0
      %284 = vmatpush2.bf16.msra.mxu0 0
      %285 = vmatprep.subr.bf16.mxu0 0
      %286 = vmatpush2.bf16.msra.mxu0 0
      %287 = vmatprep.subr.bf16.mxu0 0
      %288 = vmatpush2.bf16.msra.mxu0 0
      %289 = vmatprep.subr.bf16.mxu0 0
      %290 = vmatpush2.bf16.msra.mxu0 0
      %291 = vmatprep.mubr.bf16.mxu0 0
      %292 = vmatmul.mubr.bf16.gmra.mxu0 %v250
      %v293 = vpop.f32.mrf.mxu0
      %v294 = vadd.f32 %v221, %v293
      %v295 = vpop.f32.mrf.mxu0
      %v296 = vadd.f32 %v221, %v295
      %v297 = vpop.f32.mrf.mxu0
      %v298 = vpop.f32.mrf.mxu0
      %299 = vdwg.mxu0
      %v300 = vmax.f32 %v294, 0.0
      %v301 = vmax.f32 %v296, 0.0
      %302 = vst [vmem:[%s208] sm:$0xff] %v300
      %303 = vst [vmem:[%s208 + $0x8] sm:$0xff] %v301
      %s304 = smul.u32 2, %s19
      %p305 = scmp.lt.s32.totalorder %s18, 1
      %s306 = scalar_select %p305, %s18, 1
      %p307 = scmp.lt.s32.totalorder %s304, 1
      %s308 = scalar_select %p307, %s304, 1
      %s309 = smul.addr %s306, 2
      %s310 = sadd.s32 %s308, %s309
      %s311 = smul.addr %s310, 8
      %s312 = scalar_lea.vmem %s3, %s311
      // Predicated region
      $region33: #{fc_layer_forward.1} parent=31 // pred_check
        %p313 = pneg %p116
      $region34: #{fc_layer_forward.1} parent=31 // pred_check_branch
        %315 = sbr.rel (%p313) target = $region36
      $region35: #{fc_layer_forward.1} parent=31 // pred_region
        %s316 = smul.u32 2, %s19
      $region36: #{fc_layer_forward.1} parent=31 // pred_fallthru
        _
    $region32: #{fc_layer_forward.1} parent=5 // pred_fallthru
      _
    %p317 = scmp.le.s32.totalorder 2, %s9
    // Predicated region
    $region37: #{fc_layer_forward.1} parent=5 // pred_check
      %p318 = pneg %p317
    $region38: #{fc_layer_forward.1} parent=5 // pred_check_branch
      %320 = sbr.rel (%p318) target = $region40
    $region39: #{fc_layer_forward.1} parent=5 // pred_region
      %s321 = ssub.s32 %s9, 2
      // Predicated region
      $region41: #{fc_layer_forward.1} parent=39 // pred_check
        %p322 = pneg %p122
      $region42: #{fc_layer_forward.1} parent=39 // pred_check_branch
        %324 = sbr.rel (%p322) target = $region44
      $region43: #{fc_layer_forward.1} parent=39 // pred_region
        %s325 = smul.u32 2, %s21
        %p326 = scmp.lt.s32.totalorder %s20, 1
        %s327 = scalar_select %p326, %s20, 1
        %p328 = scmp.lt.s32.totalorder %s325, 1
        %s329 = scalar_select %p328, %s325, 1
        %s330 = smul.addr %s327, 2
        %s331 = sadd.s32 %s329, %s330
        %s332 = smul.addr %s331, 8
        %s333 = scalar_lea.vmem %s3, %s332
      $region44: #{fc_layer_forward.1} parent=39 // pred_fallthru
        _
    $region40: #{fc_layer_forward.1} parent=5 // pred_fallthru
      _
  $region6: #{fc_layer_forward.1} parent=0 // loop_footer
    %s13 = sadd.s32 1, %s9
  $region7: #{fc_layer_forward.1} parent=0 // loop_footer_branch
    %8 = sbr.rel target = $region3
  $region8: #{fc_layer_forward.1} parent=0 // loop_exit
    _

</llo_original>
